<compile_context>
chip_gen: v6e
topology: v6e:2x2x1
jax: 0.10.0
libtpu: 0.0.40
codegen_flags: <defaults>
</compile_context>

<pallas_src>
import jax
import jax.numpy as jnp
from jax.experimental import pallas as pl
from jax.experimental.pallas import tpu as pltpu

# ---- module config (matches the PyTorch Attention shapes used here) ----
WINDOW_SIZES = (2, 3)                       # len = 2
NUM_FILTERS = 16
D = len(WINDOW_SIZES) * NUM_FILTERS         # 32  (feature dim)
HIDDEN = 16
N_CLICKED = 8                               # num_clicked_news_a_user
BATCH = 4
LANES = 128


def attention_kernel(clicked_ref, w_ref, out_ref):
    """One (N, gB, 128) lane-packed batch tile.

    clicked_ref: (N, gB, 128) VMEM   (128//D batch columns packed per row)
    w_ref:       (128, 128)   VMEM   folded score matrix (see fold_attention_weights)
    out_ref:     (gB, 128)    VMEM   lane-packed user vectors
    """
    n, gb, lanes = clicked_ref.shape
    w = w_ref[...]

    # Per-clicked-news scores, broadcast across each batch element's D lanes.
    # W folds the (. v_clk) multiply, the segmented D-lane reduce, and the
    # broadcast back across the segment into one small MXU matmul per n-slice.
    scores = [jnp.dot(clicked_ref[i], w, preferred_element_type=jnp.float32)
              for i in range(n)]                                # n x (gB, 128)

    m = scores[0]
    for i in range(1, n):
        m = jnp.maximum(m, scores[i])                           # (gB, 128)

    # Softmax over the clicked-news axis + weighted sum, accumulated one
    # n-slice at a time: clicked is re-read from VMEM per slice (vld is cheap),
    # never held live in vregs across the softmax.
    denom = jnp.zeros((gb, lanes), jnp.float32)
    acc = jnp.zeros((gb, lanes), jnp.float32)
    for i in range(n):
        e_i = jnp.exp(scores[i] - m)
        denom = denom + e_i
        acc = acc + e_i * clicked_ref[i]

    out_ref[...] = (acc * pl.reciprocal(denom, approx=True)).astype(out_ref.dtype)


def fold_attention_weights(w1, w2, d):
    """Fold Linear(2d,16) -> Linear(16,1) (no activation between) into one
    (128, 128) lane-packed score matrix.

    The candidate-news contribution and both biases are constant per batch
    column under the softmax over clicked news, so they cancel exactly and are
    dropped (candidate_news never needs to be DMA'd).  Runs once per model.
    """
    assert LANES % d == 0, "feature dim must divide 128 for lane packing"
    pack = LANES // d
    v_clk = jnp.dot(w1, w2)[:d, 0]                              # (d,)
    lane = jnp.arange(LANES)
    same_seg = (lane[:, None] // d) == (lane[None, :] // d)
    # W[l', l] = v_clk[l' % d] if l' and l are in the same d-lane segment.
    return jnp.where(same_seg, jnp.tile(v_clk, pack)[:, None],
                     0.0).astype(jnp.float32)                   # (128, 128)


def attention_forward(candidate_news, clicked_news, w_score, *, block_rows=1024):
    """candidate_news: (B, D) (softmax-invariant -> unused), clicked_news: (N, B, D),
    w_score: (128, 128) from fold_attention_weights.  Returns user_vector (B, D)."""
    del candidate_news  # cancels in the softmax over clicked news
    n, b, d = clicked_news.shape
    assert LANES % d == 0, "feature dim must divide 128 for lane packing"
    pack = LANES // d

    # Lane-dense packing: `pack` batch columns per 128-lane row (free reshape).
    block_rows = max(8, (block_rows // 8) * 8)
    gb = pl.cdiv(b, pack)
    block_gb = gb if gb <= block_rows else block_rows           # full dim, or mult of 8
    n_blocks = pl.cdiv(gb, block_gb)
    gb_pad = n_blocks * block_gb
    b_pad = gb_pad * pack
    if b_pad != b:
        # Zero padding is safe: padded columns get uniform softmax -> zero output.
        clicked_news = jnp.pad(clicked_news, ((0, 0), (0, b_pad - b), (0, 0)))
    clicked_packed = clicked_news.reshape(n, gb_pad, LANES)

    out_packed = pl.pallas_call(
        attention_kernel,
        out_shape=jax.ShapeDtypeStruct((gb_pad, LANES), clicked_news.dtype),
        grid=(n_blocks,),
        in_specs=[
            pl.BlockSpec((n, block_gb, LANES), lambda i: (0, i, 0)),  # clicked (packed)
            pl.BlockSpec((LANES, LANES), lambda i: (0, 0)),           # folded score matrix
        ],
        out_specs=pl.BlockSpec((block_gb, LANES), lambda i: (i, 0)),
        compiler_params=pltpu.CompilerParams(
            dimension_semantics=("parallel",),
            vmem_limit_bytes=32 * 1024 * 1024),
    )(clicked_packed, w_score)

    return out_packed.reshape(b_pad, d)[:b]


def attention_ref(candidate_news, clicked_news, w1, b1, w2, b2):
    """Pure-JAX reference mirroring the PyTorch forward exactly."""
    n, b, d = clicked_news.shape
    cand_exp = jnp.broadcast_to(candidate_news[None], (n, b, d))
    cat = jnp.concatenate([clicked_news, cand_exp], axis=-1)            # (N,B,2D)
    s = (jnp.dot(cat, w1) + b1) @ w2 + b2                               # (N,B,1)
    wts = jax.nn.softmax(s[..., 0].T, axis=1)                           # (B,N)
    return jnp.einsum("bn,nbd->bd", wts, clicked_news)                  # (B,D)


if __name__ == "__main__":
    key = jax.random.PRNGKey(0)
    k_cand, k_click, k_w1, k_b1, k_w2, k_b2 = jax.random.split(key, 6)

    candidate_news = jax.random.normal(k_cand, (BATCH, D), dtype=jnp.float32)
    clicked_news = jax.random.normal(k_click, (N_CLICKED, BATCH, D), dtype=jnp.float32)

    # Synthetic parameters (shapes from nn.Linear(2D,16) and nn.Linear(16,1)).
    w1 = jax.random.normal(k_w1, (2 * D, HIDDEN), dtype=jnp.float32) * 0.1
    b1 = jax.random.normal(k_b1, (HIDDEN,), dtype=jnp.float32) * 0.1
    w2 = jax.random.normal(k_w2, (HIDDEN, 1), dtype=jnp.float32) * 0.1
    b2 = jax.random.normal(k_b2, (1,), dtype=jnp.float32) * 0.1

    # Fold once per model (hoisted out of the per-call path).
    w_score = fold_attention_weights(w1, w2, D)

    out = attention_forward(candidate_news, clicked_news, w_score)
    out = jax.block_until_ready(out)

    ref = attention_ref(candidate_news, clicked_news, w1, b1, w2, b2)
    assert out.shape == (BATCH, D)
    # Tolerance loosened for pl.reciprocal(approx=True) in the softmax norm.
    assert jnp.allclose(out, ref, atol=5e-3, rtol=5e-3), "mismatch vs reference"

    print("KERNEL_OK")
</pallas_src>

<mosaic_0001>
module attributes {stable_mosaic.version = 11 : i64} {
  func.func @attention_kernel(%arg0: i32, %arg1: memref<8x1x128xf32, #tpu.memory_space<vmem>>, %arg2: memref<128x128xf32, #tpu.memory_space<vmem>>, %arg3: memref<1x128xf32, #tpu.memory_space<vmem>>) attributes {dimension_semantics = [#tpu.dimension_semantics<parallel>], iteration_bounds = array<i64: 1>, scalar_prefetch = 0 : i64, scratch_operands = 0 : i64, tpu.core_type = #tpu.core_type<tc>, window_params = [{transform_indices = @transform_0, window_bounds = array<i64: 8, 1, 128>}, {pipeline_mode = #tpu.pipeline_mode<synchronous>, transform_indices = @transform_1, window_bounds = array<i64: 128, 128>}, {transform_indices = @transform_2, window_bounds = array<i64: 1, 128>}]} {
    %c0 = arith.constant 0 : index
    %c0_0 = arith.constant 0 : index
    %0 = vector.load %arg2[%c0, %c0_0] : memref<128x128xf32, #tpu.memory_space<vmem>>, vector<128x128xf32>
    %c0_1 = arith.constant 0 : index
    %c0_2 = arith.constant 0 : index
    %c0_3 = arith.constant 0 : index
    %1 = vector.load %arg1[%c0_1, %c0_2, %c0_3] : memref<8x1x128xf32, #tpu.memory_space<vmem>>, vector<1x1x128xf32>
    %2 = vector.shape_cast %1 : vector<1x1x128xf32> to vector<1x128xf32>
    %cst = arith.constant dense<0.000000e+00> : vector<1x128xf32>
    %3 = tpu.matmul %2, %0, %cst {dimension_numbers = #tpu.dot_dimension_numbers<[1], [0], [0], [1], [0, 0, 1, 1], [], []>} : vector<1x128xf32>, vector<128x128xf32>, vector<1x128xf32> -> vector<1x128xf32>
    %c1 = arith.constant 1 : index
    %c0_4 = arith.constant 0 : index
    %c0_5 = arith.constant 0 : index
    %4 = vector.load %arg1[%c1, %c0_4, %c0_5] : memref<8x1x128xf32, #tpu.memory_space<vmem>>, vector<1x1x128xf32>
    %5 = vector.shape_cast %4 : vector<1x1x128xf32> to vector<1x128xf32>
    %cst_6 = arith.constant dense<0.000000e+00> : vector<1x128xf32>
    %6 = tpu.matmul %5, %0, %cst_6 {dimension_numbers = #tpu.dot_dimension_numbers<[1], [0], [0], [1], [0, 0, 1, 1], [], []>} : vector<1x128xf32>, vector<128x128xf32>, vector<1x128xf32> -> vector<1x128xf32>
    %c2 = arith.constant 2 : index
    %c0_7 = arith.constant 0 : index
    %c0_8 = arith.constant 0 : index
    %7 = vector.load %arg1[%c2, %c0_7, %c0_8] : memref<8x1x128xf32, #tpu.memory_space<vmem>>, vector<1x1x128xf32>
    %8 = vector.shape_cast %7 : vector<1x1x128xf32> to vector<1x128xf32>
    %cst_9 = arith.constant dense<0.000000e+00> : vector<1x128xf32>
    %9 = tpu.matmul %8, %0, %cst_9 {dimension_numbers = #tpu.dot_dimension_numbers<[1], [0], [0], [1], [0, 0, 1, 1], [], []>} : vector<1x128xf32>, vector<128x128xf32>, vector<1x128xf32> -> vector<1x128xf32>
    %c3 = arith.constant 3 : index
    %c0_10 = arith.constant 0 : index
    %c0_11 = arith.constant 0 : index
    %10 = vector.load %arg1[%c3, %c0_10, %c0_11] : memref<8x1x128xf32, #tpu.memory_space<vmem>>, vector<1x1x128xf32>
    %11 = vector.shape_cast %10 : vector<1x1x128xf32> to vector<1x128xf32>
    %cst_12 = arith.constant dense<0.000000e+00> : vector<1x128xf32>
    %12 = tpu.matmul %11, %0, %cst_12 {dimension_numbers = #tpu.dot_dimension_numbers<[1], [0], [0], [1], [0, 0, 1, 1], [], []>} : vector<1x128xf32>, vector<128x128xf32>, vector<1x128xf32> -> vector<1x128xf32>
    %c4 = arith.constant 4 : index
    %c0_13 = arith.constant 0 : index
    %c0_14 = arith.constant 0 : index
    %13 = vector.load %arg1[%c4, %c0_13, %c0_14] : memref<8x1x128xf32, #tpu.memory_space<vmem>>, vector<1x1x128xf32>
    %14 = vector.shape_cast %13 : vector<1x1x128xf32> to vector<1x128xf32>
    %cst_15 = arith.constant dense<0.000000e+00> : vector<1x128xf32>
    %15 = tpu.matmul %14, %0, %cst_15 {dimension_numbers = #tpu.dot_dimension_numbers<[1], [0], [0], [1], [0, 0, 1, 1], [], []>} : vector<1x128xf32>, vector<128x128xf32>, vector<1x128xf32> -> vector<1x128xf32>
    %c5 = arith.constant 5 : index
    %c0_16 = arith.constant 0 : index
    %c0_17 = arith.constant 0 : index
    %16 = vector.load %arg1[%c5, %c0_16, %c0_17] : memref<8x1x128xf32, #tpu.memory_space<vmem>>, vector<1x1x128xf32>
    %17 = vector.shape_cast %16 : vector<1x1x128xf32> to vector<1x128xf32>
    %cst_18 = arith.constant dense<0.000000e+00> : vector<1x128xf32>
    %18 = tpu.matmul %17, %0, %cst_18 {dimension_numbers = #tpu.dot_dimension_numbers<[1], [0], [0], [1], [0, 0, 1, 1], [], []>} : vector<1x128xf32>, vector<128x128xf32>, vector<1x128xf32> -> vector<1x128xf32>
    %c6 = arith.constant 6 : index
    %c0_19 = arith.constant 0 : index
    %c0_20 = arith.constant 0 : index
    %19 = vector.load %arg1[%c6, %c0_19, %c0_20] : memref<8x1x128xf32, #tpu.memory_space<vmem>>, vector<1x1x128xf32>
    %20 = vector.shape_cast %19 : vector<1x1x128xf32> to vector<1x128xf32>
    %cst_21 = arith.constant dense<0.000000e+00> : vector<1x128xf32>
    %21 = tpu.matmul %20, %0, %cst_21 {dimension_numbers = #tpu.dot_dimension_numbers<[1], [0], [0], [1], [0, 0, 1, 1], [], []>} : vector<1x128xf32>, vector<128x128xf32>, vector<1x128xf32> -> vector<1x128xf32>
    %c7 = arith.constant 7 : index
    %c0_22 = arith.constant 0 : index
    %c0_23 = arith.constant 0 : index
    %22 = vector.load %arg1[%c7, %c0_22, %c0_23] : memref<8x1x128xf32, #tpu.memory_space<vmem>>, vector<1x1x128xf32>
    %23 = vector.shape_cast %22 : vector<1x1x128xf32> to vector<1x128xf32>
    %cst_24 = arith.constant dense<0.000000e+00> : vector<1x128xf32>
    %24 = tpu.matmul %23, %0, %cst_24 {dimension_numbers = #tpu.dot_dimension_numbers<[1], [0], [0], [1], [0, 0, 1, 1], [], []>} : vector<1x128xf32>, vector<128x128xf32>, vector<1x128xf32> -> vector<1x128xf32>
    %25 = arith.maximumf %3, %6 : vector<1x128xf32>
    %26 = arith.maximumf %25, %9 : vector<1x128xf32>
    %27 = arith.maximumf %26, %12 : vector<1x128xf32>
    %28 = arith.maximumf %27, %15 : vector<1x128xf32>
    %29 = arith.maximumf %28, %18 : vector<1x128xf32>
    %30 = arith.maximumf %29, %21 : vector<1x128xf32>
    %31 = arith.maximumf %30, %24 : vector<1x128xf32>
    %cst_25 = arith.constant 0.000000e+00 : f32
    %32 = vector.broadcast %cst_25 : f32 to vector<1x128xf32>
    %cst_26 = arith.constant 0.000000e+00 : f32
    %33 = vector.broadcast %cst_26 : f32 to vector<1x128xf32>
    %34 = arith.subf %3, %31 : vector<1x128xf32>
    %35 = math.exp %34 : vector<1x128xf32>
    %36 = arith.addf %32, %35 : vector<1x128xf32>
    %c0_27 = arith.constant 0 : index
    %c0_28 = arith.constant 0 : index
    %c0_29 = arith.constant 0 : index
    %37 = vector.load %arg1[%c0_27, %c0_28, %c0_29] : memref<8x1x128xf32, #tpu.memory_space<vmem>>, vector<1x1x128xf32>
    %38 = vector.shape_cast %37 : vector<1x1x128xf32> to vector<1x128xf32>
    %39 = arith.mulf %35, %38 : vector<1x128xf32>
    %40 = arith.addf %33, %39 : vector<1x128xf32>
    %41 = arith.subf %6, %31 : vector<1x128xf32>
    %42 = math.exp %41 : vector<1x128xf32>
    %43 = arith.addf %36, %42 : vector<1x128xf32>
    %c1_30 = arith.constant 1 : index
    %c0_31 = arith.constant 0 : index
    %c0_32 = arith.constant 0 : index
    %44 = vector.load %arg1[%c1_30, %c0_31, %c0_32] : memref<8x1x128xf32, #tpu.memory_space<vmem>>, vector<1x1x128xf32>
    %45 = vector.shape_cast %44 : vector<1x1x128xf32> to vector<1x128xf32>
    %46 = arith.mulf %42, %45 : vector<1x128xf32>
    %47 = arith.addf %40, %46 : vector<1x128xf32>
    %48 = arith.subf %9, %31 : vector<1x128xf32>
    %49 = math.exp %48 : vector<1x128xf32>
    %50 = arith.addf %43, %49 : vector<1x128xf32>
    %c2_33 = arith.constant 2 : index
    %c0_34 = arith.constant 0 : index
    %c0_35 = arith.constant 0 : index
    %51 = vector.load %arg1[%c2_33, %c0_34, %c0_35] : memref<8x1x128xf32, #tpu.memory_space<vmem>>, vector<1x1x128xf32>
    %52 = vector.shape_cast %51 : vector<1x1x128xf32> to vector<1x128xf32>
    %53 = arith.mulf %49, %52 : vector<1x128xf32>
    %54 = arith.addf %47, %53 : vector<1x128xf32>
    %55 = arith.subf %12, %31 : vector<1x128xf32>
    %56 = math.exp %55 : vector<1x128xf32>
    %57 = arith.addf %50, %56 : vector<1x128xf32>
    %c3_36 = arith.constant 3 : index
    %c0_37 = arith.constant 0 : index
    %c0_38 = arith.constant 0 : index
    %58 = vector.load %arg1[%c3_36, %c0_37, %c0_38] : memref<8x1x128xf32, #tpu.memory_space<vmem>>, vector<1x1x128xf32>
    %59 = vector.shape_cast %58 : vector<1x1x128xf32> to vector<1x128xf32>
    %60 = arith.mulf %56, %59 : vector<1x128xf32>
    %61 = arith.addf %54, %60 : vector<1x128xf32>
    %62 = arith.subf %15, %31 : vector<1x128xf32>
    %63 = math.exp %62 : vector<1x128xf32>
    %64 = arith.addf %57, %63 : vector<1x128xf32>
    %c4_39 = arith.constant 4 : index
    %c0_40 = arith.constant 0 : index
    %c0_41 = arith.constant 0 : index
    %65 = vector.load %arg1[%c4_39, %c0_40, %c0_41] : memref<8x1x128xf32, #tpu.memory_space<vmem>>, vector<1x1x128xf32>
    %66 = vector.shape_cast %65 : vector<1x1x128xf32> to vector<1x128xf32>
    %67 = arith.mulf %63, %66 : vector<1x128xf32>
    %68 = arith.addf %61, %67 : vector<1x128xf32>
    %69 = arith.subf %18, %31 : vector<1x128xf32>
    %70 = math.exp %69 : vector<1x128xf32>
    %71 = arith.addf %64, %70 : vector<1x128xf32>
    %c5_42 = arith.constant 5 : index
    %c0_43 = arith.constant 0 : index
    %c0_44 = arith.constant 0 : index
    %72 = vector.load %arg1[%c5_42, %c0_43, %c0_44] : memref<8x1x128xf32, #tpu.memory_space<vmem>>, vector<1x1x128xf32>
    %73 = vector.shape_cast %72 : vector<1x1x128xf32> to vector<1x128xf32>
    %74 = arith.mulf %70, %73 : vector<1x128xf32>
    %75 = arith.addf %68, %74 : vector<1x128xf32>
    %76 = arith.subf %21, %31 : vector<1x128xf32>
    %77 = math.exp %76 : vector<1x128xf32>
    %78 = arith.addf %71, %77 : vector<1x128xf32>
    %c6_45 = arith.constant 6 : index
    %c0_46 = arith.constant 0 : index
    %c0_47 = arith.constant 0 : index
    %79 = vector.load %arg1[%c6_45, %c0_46, %c0_47] : memref<8x1x128xf32, #tpu.memory_space<vmem>>, vector<1x1x128xf32>
    %80 = vector.shape_cast %79 : vector<1x1x128xf32> to vector<1x128xf32>
    %81 = arith.mulf %77, %80 : vector<1x128xf32>
    %82 = arith.addf %75, %81 : vector<1x128xf32>
    %83 = arith.subf %24, %31 : vector<1x128xf32>
    %84 = math.exp %83 : vector<1x128xf32>
    %85 = arith.addf %78, %84 : vector<1x128xf32>
    %c7_48 = arith.constant 7 : index
    %c0_49 = arith.constant 0 : index
    %c0_50 = arith.constant 0 : index
    %86 = vector.load %arg1[%c7_48, %c0_49, %c0_50] : memref<8x1x128xf32, #tpu.memory_space<vmem>>, vector<1x1x128xf32>
    %87 = vector.shape_cast %86 : vector<1x1x128xf32> to vector<1x128xf32>
    %88 = arith.mulf %84, %87 : vector<1x128xf32>
    %89 = arith.addf %82, %88 : vector<1x128xf32>
    %90 = tpu.reciprocal %85 {approx = true} : vector<1x128xf32> -> vector<1x128xf32>
    %91 = arith.mulf %89, %90 : vector<1x128xf32>
    %c0_51 = arith.constant 0 : index
    %c0_52 = arith.constant 0 : index
    %92 = vector.load %arg3[%c0_51, %c0_52] : memref<1x128xf32, #tpu.memory_space<vmem>>, vector<1x128xf32>
    tpu.vector_store %arg3[%c0_51, %c0_52], %91 {strides = array<i32>} : memref<1x128xf32, #tpu.memory_space<vmem>>, vector<1x128xf32>,
    return
  }
  func.func @transform_0(%arg0: i32) -> (i32, i32, i32) {
    %c0_i32 = arith.constant 0 : i32
    %c0_i32_0 = arith.constant 0 : i32
    %c0_i32_1 = arith.constant 0 : i32
    return %c0_i32, %arg0, %c0_i32_0 : i32, i32, i32
  }
  func.func @transform_1(%arg0: i32) -> (i32, i32) {
    %c0_i32 = arith.constant 0 : i32
    %c0_i32_0 = arith.constant 0 : i32
    %c0_i32_1 = arith.constant 0 : i32
    return %c0_i32, %c0_i32_0 : i32, i32
  }
  func.func @transform_2(%arg0: i32) -> (i32, i32) {
    %c0_i32 = arith.constant 0 : i32
    %c0_i32_0 = arith.constant 0 : i32
    return %arg0, %c0_i32 : i32, i32
  }
}

</mosaic_0001>

<llo_original>
// kernel: tpu_custom_call.1
$region0: #{tpu_custom_call.1}
  #allocation0 [shape = 'u32[]', space=smem, size = 0x4, offset = 0x4, fixed_abs, tag = 'smem constant byte address 0x4 - core index']
  #allocation1 [shape = 'u32[144,128]{1,0:T(1,128)}', space=vmem, size = 0x12000, scoped, tag = 'internal scratch']
  %s0 = inlined_call_operand.hbm [shape: f32[8,1,128], index: 0, kind: input, shape index: {}]
  %s1 = inlined_call_operand.hbm [shape: f32[128,128], index: 1, kind: input, shape index: {}]
  %s2 = inlined_call_operand.hbm [shape: f32[1,128], index: 2, kind: output, shape index: {}]
  %s3 = sld [smem:[#allocation0]]
  $region26: #{tpu_custom_call.1} parent=0
    _
  %s5 = ssub.s32 1, %s3
  %s6 = scalar_select 0, %s5, %s3
  $region1: #{tpu_custom_call.1} parent=0
    #allocation2 [shape = 'u8[4096]{0}', space=vmem, size = 0x1000, scoped, tag = 'input window, operand 0, single buffered']
    #allocation3 [shape = 's32[1]{0}', space=sflag, size = 0x4, scoped, tag = 'scoped memory for tpu_custom_call.1']
    #allocation4 [shape = 's32[1]{0}', space=sflag, size = 0x4, scoped, tag = 'scoped memory for tpu_custom_call.1']
    #allocation5 [shape = 'u8[65536]{0}', space=vmem, size = 0x10000, scoped, tag = 'input window, operand 1, single buffered']
    #allocation6 [shape = 's32[1]{0}', space=sflag, size = 0x4, scoped, tag = 'scoped memory for tpu_custom_call.1']
    #allocation7 [shape = 'u8[512]{0}', space=vmem, size = 0x400, scoped, tag = 'output window, operand 0, single buffered']
    %7 = vsyncpa [#allocation3], 0
    %8 = vsyncpa [#allocation6], 0
    %9 = vsyncpa [#allocation4], 0
    // Predicated region
    $region2: #{tpu_custom_call.1} parent=1 // pred_check
      _
    $region3: #{tpu_custom_call.1} parent=1 // pred_check_branch
      %11 = sbr.rel (0) target = $region5
    $region4: #{tpu_custom_call.1} parent=1 // pred_region
      %s13 = ssub.s32 128, 128
      %14 = vsyncadd [#allocation3], %s13
      %s15 = sshll.u32 [#allocation2], 4
      %s16 = int_to_ptr.vmem [resolvable:$true] %s15
      %21 = dma.hbm_to_vmem [thread:$0]  %s0, 128, %s16, [#allocation3], 16, 16, 1
    $region5: #{tpu_custom_call.1} parent=1 // pred_fallthru
      _
    // Predicated region
    $region6: #{tpu_custom_call.1} parent=1 // pred_check
      _
    $region7: #{tpu_custom_call.1} parent=1 // pred_check_branch
      %23 = sbr.rel (0) target = $region9
    $region8: #{tpu_custom_call.1} parent=1 // pred_region
      %s25 = ssub.s32 2048, 2048
      %26 = vsyncadd [#allocation6], %s25
      %s27 = sshll.u32 [#allocation5], 4
      %s28 = int_to_ptr.vmem [resolvable:$true] %s27
      %33 = dma.hbm_to_vmem [thread:$0]  %s1, 2048, %s28, [#allocation6], 128, 128, 8
    $region9: #{tpu_custom_call.1} parent=1 // pred_fallthru
      _
    // Predicated region
    $region10: #{tpu_custom_call.1} parent=1 // pred_check
      _
    $region11: #{tpu_custom_call.1} parent=1 // pred_check_branch
      %35 = sbr.rel (0) target = $region13
    $region12: #{tpu_custom_call.1} parent=1 // pred_region
      %36 = dma.done [#allocation3], 128
    $region13: #{tpu_custom_call.1} parent=1 // pred_fallthru
      _
    // Predicated region
    $region14: #{tpu_custom_call.1} parent=1 // pred_check
      _
    $region15: #{tpu_custom_call.1} parent=1 // pred_check_branch
      %38 = sbr.rel (0) target = $region17
    $region16: #{tpu_custom_call.1} parent=1 // pred_region
      %39 = dma.done [#allocation6], 2048
    $region17: #{tpu_custom_call.1} parent=1 // pred_fallthru
      _
    %v40 = vld [vmem:[#allocation5] sm:$0xff]
    %v41 = vld [vmem:[#allocation5 + $0x8] sm:$0xff]
    %v42 = vld [vmem:[#allocation5 + $0x10] sm:$0xff]
    %v43 = vld [vmem:[#allocation5 + $0x18] sm:$0xff]
    %v44 = vld [vmem:[#allocation5 + $0x20] sm:$0xff]
    %v45 = vld [vmem:[#allocation5 + $0x28] sm:$0xff]
    %v46 = vld [vmem:[#allocation5 + $0x30] sm:$0xff]
    %v47 = vld [vmem:[#allocation5 + $0x38] sm:$0xff]
    %v48 = vld [vmem:[#allocation5 + $0x40] sm:$0xff]
    %v49 = vld [vmem:[#allocation5 + $0x48] sm:$0xff]
    %v50 = vld [vmem:[#allocation5 + $0x50] sm:$0xff]
    %v51 = vld [vmem:[#allocation5 + $0x58] sm:$0xff]
    %v52 = vld [vmem:[#allocation5 + $0x60] sm:$0xff]
    %v53 = vld [vmem:[#allocation5 + $0x68] sm:$0xff]
    %v54 = vld [vmem:[#allocation5 + $0x70] sm:$0xff]
    %v55 = vld [vmem:[#allocation5 + $0x78] sm:$0xff]
    %v56 = vld [vmem:[#allocation2] sm:$0x1]
    %57 = vmatprep.subr.mxu0 0.0
    %58 = vmatpush1.msra.mxu0 %v55
    %59 = vmatprep.subr.mxu0 0.0
    %60 = vmatpush1.msra.mxu0 %v54
    %61 = vmatprep.subr.mxu0 0.0
    %62 = vmatpush1.msra.mxu0 %v53
    %63 = vmatprep.subr.mxu0 0.0
    %64 = vmatpush1.msra.mxu0 %v52
    %65 = vmatprep.subr.mxu0 0.0
    %66 = vmatpush1.msra.mxu0 %v51
    %67 = vmatprep.subr.mxu0 0.0
    %68 = vmatpush1.msra.mxu0 %v50
    %69 = vmatprep.subr.mxu0 0.0
    %70 = vmatpush1.msra.mxu0 %v49
    %71 = vmatprep.subr.mxu0 0.0
    %72 = vmatpush1.msra.mxu0 %v48
    %73 = vmatprep.subr.mxu0 0.0
    %74 = vmatpush1.msra.mxu0 %v47
    %75 = vmatprep.subr.mxu0 0.0
    %76 = vmatpush1.msra.mxu0 %v46
    %77 = vmatprep.subr.mxu0 0.0
    %78 = vmatpush1.msra.mxu0 %v45
    %79 = vmatprep.subr.mxu0 0.0
    %80 = vmatpush1.msra.mxu0 %v44
    %81 = vmatprep.subr.mxu0 0.0
    %82 = vmatpush1.msra.mxu0 %v43
    %83 = vmatprep.subr.mxu0 0.0
    %84 = vmatpush1.msra.mxu0 %v42
    %85 = vmatprep.subr.mxu0 0.0
    %86 = vmatpush1.msra.mxu0 %v41
    %87 = vmatprep.subr.mxu0 0.0
    %88 = vmatpush1.msra.mxu0 %v40
    %89 = vmatprep.subr.mxu0 0.0
    %90 = vmatpush2.msra.mxu0 0.0
    %91 = vmatprep.subr.mxu0 0.0
    %92 = vmatpush2.msra.mxu0 0.0
    %93 = vmatprep.subr.mxu0 0.0
    %94 = vmatpush2.msra.mxu0 0.0
    %95 = vmatprep.subr.mxu0 0.0
    %96 = vmatpush2.msra.mxu0 0.0
    %97 = vmatprep.subr.mxu0 0.0
    %98 = vmatpush2.msra.mxu0 0.0
    %99 = vmatprep.subr.mxu0 0.0
    %100 = vmatpush2.msra.mxu0 0.0
    %101 = vmatprep.subr.mxu0 0.0
    %102 = vmatpush2.msra.mxu0 0.0
    %103 = vmatprep.subr.mxu0 0.0
    %104 = vmatpush2.msra.mxu0 0.0
    %105 = vmatprep.subr.mxu0 0.0
    %106 = vmatpush2.msra.mxu0 0.0
    %107 = vmatprep.subr.mxu0 0.0
    %108 = vmatpush2.msra.mxu0 0.0
    %109 = vmatprep.subr.mxu0 0.0
    %110 = vmatpush2.msra.mxu0 0.0
    %111 = vmatprep.subr.mxu0 0.0
    %112 = vmatpush2.msra.mxu0 0.0
    %113 = vmatprep.subr.mxu0 0.0
    %114 = vmatpush2.msra.mxu0 0.0
    %115 = vmatprep.subr.mxu0 0.0
    %116 = vmatpush2.msra.mxu0 0.0
    %117 = vmatprep.subr.mxu0 0.0
    %118 = vmatpush2.msra.mxu0 0.0
    %119 = vmatprep.subr.mxu0 0.0
    %120 = vmatpush2.msra.mxu0 0.0
    %121 = vmatprep.mubr.f32.mxu0 0.0
    %122 = vmatmul.mubr.f32.gmra.mxu0 %v56
    %v123 = vpop.f32.mrf.mxu0
    %v124 = vadd.f32 0.0, %v123
    %v125 = vpop.f32.mrf.mxu0
    %126 = vdwg.mxu0
    %s127 = scalar_lea.vmem [#allocation2], 1
    %v128 = vld [vmem:[%s127] sm:$0x1]
    %129 = vmatprep.subr.mxu0 0.0
    %130 = vmatpush1.msra.mxu0 %v55
    %131 = vmatprep.subr.mxu0 0.0
    %132 = vmatpush1.msra.mxu0 %v54
    %133 = vmatprep.subr.mxu0 0.0
    %134 = vmatpush1.msra.mxu0 %v53
    %135 = vmatprep.subr.mxu0 0.0
    %136 = vmatpush1.msra.mxu0 %v52
    %137 = vmatprep.subr.mxu0 0.0
    %138 = vmatpush1.msra.mxu0 %v51
    %139 = vmatprep.subr.mxu0 0.0
    %140 = vmatpush1.msra.mxu0 %v50
    %141 = vmatprep.subr.mxu0 0.0
    %142 = vmatpush1.msra.mxu0 %v49
    %143 = vmatprep.subr.mxu0 0.0
    %144 = vmatpush1.msra.mxu0 %v48
    %145 = vmatprep.subr.mxu0 0.0
    %146 = vmatpush1.msra.mxu0 %v47
    %147 = vmatprep.subr.mxu0 0.0
    %148 = vmatpush1.msra.mxu0 %v46
    %149 = vmatprep.subr.mxu0 0.0
    %150 = vmatpush1.msra.mxu0 %v45
    %151 = vmatprep.subr.mxu0 0.0
    %152 = vmatpush1.msra.mxu0 %v44
    %153 = vmatprep.subr.mxu0 0.0
    %154 = vmatpush1.msra.mxu0 %v43
    %155 = vmatprep.subr.mxu0 0.0
    %156 = vmatpush1.msra.mxu0 %v42
    %157 = vmatprep.subr.mxu0 0.0
    %158 = vmatpush1.msra.mxu0 %v41
    %159 = vmatprep.subr.mxu0 0.0
    %160 = vmatpush1.msra.mxu0 %v40
    %161 = vmatprep.subr.mxu0 0.0
    %162 = vmatpush2.msra.mxu0 0.0
    %163 = vmatprep.subr.mxu0 0.0
    %164 = vmatpush2.msra.mxu0 0.0
    %165 = vmatprep.subr.mxu0 0.0
    %166 = vmatpush2.msra.mxu0 0.0
    %167 = vmatprep.subr.mxu0 0.0
    %168 = vmatpush2.msra.mxu0 0.0
    %169 = vmatprep.subr.mxu0 0.0
    %170 = vmatpush2.msra.mxu0 0.0
    %171 = vmatprep.subr.mxu0 0.0
    %172 = vmatpush2.msra.mxu0 0.0
    %173 = vmatprep.subr.mxu0 0.0
    %174 = vmatpush2.msra.mxu0 0.0
    %175 = vmatprep.subr.mxu0 0.0
    %176 = vmatpush2.msra.mxu0 0.0
    %177 = vmatprep.subr.mxu0 0.0
    %178 = vmatpush2.msra.mxu0 0.0
    %179 = vmatprep.subr.mxu0 0.0
    %180 = vmatpush2.msra.mxu0 0.0
    %181 = vmatprep.subr.mxu0 0.0
    %182 = vmatpush2.msra.mxu0 0.0
    %183 = vmatprep.subr.mxu0 0.0
    %184 = vmatpush2.msra.mxu0 0.0
    %185 = vmatprep.subr.mxu0 0.0
    %186 = vmatpush2.msra.mxu0 0.0
    %187 = vmatprep.subr.mxu0 0.0
    %188 = vmatpush2.msra.mxu0 0.0
    %189 = vmatprep.subr.mxu0 0.0
    %190 = vmatpush2.msra.mxu0 0.0
    %191 = vmatprep.subr.mxu0 0.0
    %192 = vmatpush2.msra.mxu0 0.0
    %193 = vmatprep.mubr.f32.mxu0 0.0
    %194 = vmatmul.mubr.f32.gmra.mxu0 %v128
    %v195 = vpop.f32.mrf.mxu0
    %v196 = vadd.f32 0.0, %v195
    %v197 = vpop.f32.mrf.mxu0
    %198 = vdwg.mxu0
    %s199 = scalar_lea.vmem [#allocation2], 2
    %v200 = vld [vmem:[%s199] sm:$0x1]
    %201 = vmatprep.subr.mxu0 0.0
    %202 = vmatpush1.msra.mxu0 %v55
    %203 = vmatprep.subr.mxu0 0.0
    %204 = vmatpush1.msra.mxu0 %v54
    %205 = vmatprep.subr.mxu0 0.0
    %206 = vmatpush1.msra.mxu0 %v53
    %207 = vmatprep.subr.mxu0 0.0
    %208 = vmatpush1.msra.mxu0 %v52
    %209 = vmatprep.subr.mxu0 0.0
    %210 = vmatpush1.msra.mxu0 %v51
    %211 = vmatprep.subr.mxu0 0.0
    %212 = vmatpush1.msra.mxu0 %v50
    %213 = vmatprep.subr.mxu0 0.0
    %214 = vmatpush1.msra.mxu0 %v49
    %215 = vmatprep.subr.mxu0 0.0
    %216 = vmatpush1.msra.mxu0 %v48
    %217 = vmatprep.subr.mxu0 0.0
    %218 = vmatpush1.msra.mxu0 %v47
    %219 = vmatprep.subr.mxu0 0.0
    %220 = vmatpush1.msra.mxu0 %v46
    %221 = vmatprep.subr.mxu0 0.0
    %222 = vmatpush1.msra.mxu0 %v45
    %223 = vmatprep.subr.mxu0 0.0
    %224 = vmatpush1.msra.mxu0 %v44
    %225 = vmatprep.subr.mxu0 0.0
    %226 = vmatpush1.msra.mxu0 %v43
    %227 = vmatprep.subr.mxu0 0.0
    %228 = vmatpush1.msra.mxu0 %v42
    %229 = vmatprep.subr.mxu0 0.0
    %230 = vmatpush1.msra.mxu0 %v41
    %231 = vmatprep.subr.mxu0 0.0
    %232 = vmatpush1.msra.mxu0 %v40
    %233 = vmatprep.subr.mxu0 0.0
    %234 = vmatpush2.msra.mxu0 0.0
    %235 = vmatprep.subr.mxu0 0.0
    %236 = vmatpush2.msra.mxu0 0.0
    %237 = vmatprep.subr.mxu0 0.0
    %238 = vmatpush2.msra.mxu0 0.0
    %239 = vmatprep.subr.mxu0 0.0
    %240 = vmatpush2.msra.mxu0 0.0
    %241 = vmatprep.subr.mxu0 0.0
    %242 = vmatpush2.msra.mxu0 0.0
    %243 = vmatprep.subr.mxu0 0.0
    %244 = vmatpush2.msra.mxu0 0.0
    %245 = vmatprep.subr.mxu0 0.0
    %246 = vmatpush2.msra.mxu0 0.0
    %247 = vmatprep.subr.mxu0 0.0
    %248 = vmatpush2.msra.mxu0 0.0
    %249 = vmatprep.subr.mxu0 0.0
    %250 = vmatpush2.msra.mxu0 0.0
    %251 = vmatprep.subr.mxu0 0.0
    %252 = vmatpush2.msra.mxu0 0.0
    %253 = vmatprep.subr.mxu0 0.0
    %254 = vmatpush2.msra.mxu0 0.0
    %255 = vmatprep.subr.mxu0 0.0
    %256 = vmatpush2.msra.mxu0 0.0
    %257 = vmatprep.subr.mxu0 0.0
    %258 = vmatpush2.msra.mxu0 0.0
    %259 = vmatprep.subr.mxu0 0.0
    %260 = vmatpush2.msra.mxu0 0.0
    %261 = vmatprep.subr.mxu0 0.0
    %262 = vmatpush2.msra.mxu0 0.0
    %263 = vmatprep.subr.mxu0 0.0
    %264 = vmatpush2.msra.mxu0 0.0
    %265 = vmatprep.mubr.f32.mxu0 0.0
    %266 = vmatmul.mubr.f32.gmra.mxu0 %v200
    %v267 = vpop.f32.mrf.mxu0
    %v268 = vadd.f32 0.0, %v267
    %v269 = vpop.f32.mrf.mxu0
    %270 = vdwg.mxu0
    %s271 = scalar_lea.vmem [#allocation2], 3
    %v272 = vld [vmem:[%s271] sm:$0x1]
    %273 = vmatprep.subr.mxu0 0.0
    %274 = vmatpush1.msra.mxu0 %v55
    %275 = vmatprep.subr.mxu0 0.0
    %276 = vmatpush1.msra.mxu0 %v54
    %277 = vmatprep.subr.mxu0 0.0
    %278 = vmatpush1.msra.mxu0 %v53
    %279 = vmatprep.subr.mxu0 0.0
    %280 = vmatpush1.msra.mxu0 %v52
    %281 = vmatprep.subr.mxu0 0.0
    %282 = vmatpush1.msra.mxu0 %v51
    %283 = vmatprep.subr.mxu0 0.0
    %284 = vmatpush1.msra.mxu0 %v50
    %285 = vmatprep.subr.mxu0 0.0
    %286 = vmatpush1.msra.mxu0 %v49
    %287 = vmatprep.subr.mxu0 0.0
    %288 = vmatpush1.msra.mxu0 %v48
    %289 = vmatprep.subr.mxu0 0.0
    %290 = vmatpush1.msra.mxu0 %v47
    %291 = vmatprep.subr.mxu0 0.0
    %292 = vmatpush1.msra.mxu0 %v46
    %293 = vmatprep.subr.mxu0 0.0
    %294 = vmatpush1.msra.mxu0 %v45
    %295 = vmatprep.subr.mxu0 0.0
    %296 = vmatpush1.msra.mxu0 %v44
    %297 = vmatprep.subr.mxu0 0.0
    %298 = vmatpush1.msra.mxu0 %v43
    %299 = vmatprep.subr.mxu0 0.0
    %300 = vmatpush1.msra.mxu0 %v42
    %301 = vmatprep.subr.mxu0 0.0
    %302 = vmatpush1.msra.mxu0 %v41
    %303 = vmatprep.subr.mxu0 0.0
    %304 = vmatpush1.msra.mxu0 %v40
    %305 = vmatprep.subr.mxu0 0.0
    %306 = vmatpush2.msra.mxu0 0.0
    %307 = vmatprep.subr.mxu0 0.0
    %308 = vmatpush2.msra.mxu0 0.0
    %309 = vmatprep.subr.mxu0 0.0
    %310 = vmatpush2.msra.mxu0 0.0
    %311 = vmatprep.subr.mxu0 0.0
    %312 = vmatpush2.msra.mxu0 0.0
    %313 = vmatprep.subr.mxu0 0.0
    %314 = vmatpush2.msra.mxu0 0.0
    %315 = vmatprep.subr.mxu0 0.0
    %316 = vmatpush2.msra.mxu0 0.0
    %317 = vmatprep.subr.mxu0 0.0
    %318 = vmatpush2.msra.mxu0 0.0
    %319 = vmatprep.subr.mxu0 0.0
    %320 = vmatpush2.msra.mxu0 0.0
    %321 = vmatprep.subr.mxu0 0.0
    %322 = vmatpush2.msra.mxu0 0.0
    %323 = vmatprep.subr.mxu0 0.0
    %324 = vmatpush2.msra.mxu0 0.0
    %325 = vmatprep.subr.mxu0 0.0
    %326 = vmatpush2.msra.mxu0 0.0
    %327 = vmatprep.subr.mxu0 0.0
    %328 = vmatpush2.msra.mxu0 0.0
    %329 = vmatprep.subr.mxu0 0.0
    %330 = vmatpush2.msra.mxu0 0.0
    %331 = vmatprep.subr.mxu0 0.0
    %332 = vmatpush2.msra.mxu0 0.0
    %333 = vmatprep.subr.mxu0 0.0
    %334 = vmatpush2.msra.mxu0 0.0
    %335 = vmatprep.subr.mxu0 0.0
    %336 = vmatpush2.msra.mxu0 0.0
    %337 = vmatprep.mubr.f32.mxu0 0.0
    %338 = vmatmul.mubr.f32.gmra.mxu0 %v272
    %v339 = vpop.f32.mrf.mxu0
    %v340 = vadd.f32 0.0, %v339
    %v341 = vpop.f32.mrf.mxu0
    %342 = vdwg.mxu0
    %s343 = scalar_lea.vmem [#allocation2], 4
    %v344 = vld [vmem:[%s343] sm:$0x1]
    %345 = vmatprep.subr.mxu0 0.0
    %346 = vmatpush1.msra.mxu0 %v55
    %347 = vmatprep.subr.mxu0 0.0
    %348 = vmatpush1.msra.mxu0 %v54
    %349 = vmatprep.subr.mxu0 0.0
    %350 = vmatpush1.msra.mxu0 %v53
    %351 = vmatprep.subr.mxu0 0.0
    %352 = vmatpush1.msra.mxu0 %v52
    %353 = vmatprep.subr.mxu0 0.0
    %354 = vmatpush1.msra.mxu0 %v51
    %355 = vmatprep.subr.mxu0 0.0
    %356 = vmatpush1.msra.mxu0 %v50
    %357 = vmatprep.subr.mxu0 0.0
    %358 = vmatpush1.msra.mxu0 %v49
    %359 = vmatprep.subr.mxu0 0.0
    %360 = vmatpush1.msra.mxu0 %v48
    %361 = vmatprep.subr.mxu0 0.0
    %362 = vmatpush1.msra.mxu0 %v47
    %363 = vmatprep.subr.mxu0 0.0
    %364 = vmatpush1.msra.mxu0 %v46
    %365 = vmatprep.subr.mxu0 0.0
    %366 = vmatpush1.msra.mxu0 %v45
    %367 = vmatprep.subr.mxu0 0.0
    %368 = vmatpush1.msra.mxu0 %v44
    %369 = vmatprep.subr.mxu0 0.0
    %370 = vmatpush1.msra.mxu0 %v43
    %371 = vmatprep.subr.mxu0 0.0
    %372 = vmatpush1.msra.mxu0 %v42
    %373 = vmatprep.subr.mxu0 0.0
    %374 = vmatpush1.msra.mxu0 %v41
    %375 = vmatprep.subr.mxu0 0.0
    %376 = vmatpush1.msra.mxu0 %v40
    %377 = vmatprep.subr.mxu0 0.0
    %378 = vmatpush2.msra.mxu0 0.0
    %379 = vmatprep.subr.mxu0 0.0
    %380 = vmatpush2.msra.mxu0 0.0
    %381 = vmatprep.subr.mxu0 0.0
    %382 = vmatpush2.msra.mxu0 0.0
    %383 = vmatprep.subr.mxu0 0.0
    %384 = vmatpush2.msra.mxu0 0.0
    %385 = vmatprep.subr.mxu0 0.0
    %386 = vmatpush2.msra.mxu0 0.0
    %387 = vmatprep.subr.mxu0 0.0
    %388 = vmatpush2.msra.mxu0 0.0
    %389 = vmatprep.subr.mxu0 0.0
    %390 = vmatpush2.msra.mxu0 0.0
    %391 = vmatprep.subr.mxu0 0.0
    %392 = vmatpush2.msra.mxu0 0.0
    %393 = vmatprep.subr.mxu0 0.0
    %394 = vmatpush2.msra.mxu0 0.0
    %395 = vmatprep.subr.mxu0 0.0
    %396 = vmatpush2.msra.mxu0 0.0
    %397 = vmatprep.subr.mxu0 0.0
    %398 = vmatpush2.msra.mxu0 0.0
    %399 = vmatprep.subr.mxu0 0.0
    %400 = vmatpush2.msra.mxu0 0.0
    %401 = vmatprep.subr.mxu0 0.0
    %402 = vmatpush2.msra.mxu0 0.0
    %403 = vmatprep.subr.mxu0 0.0
    %404 = vmatpush2.msra.mxu0 0.0
    %405 = vmatprep.subr.mxu0 0.0
    %406 = vmatpush2.msra.mxu0 0.0
    %407 = vmatprep.subr.mxu0 0.0
    %408 = vmatpush2.msra.mxu0 0.0
    %409 = vmatprep.mubr.f32.mxu0 0.0
    %410 = vmatmul.mubr.f32.gmra.mxu0 %v344
    %v411 = vpop.f32.mrf.mxu0
    %v412 = vadd.f32 0.0, %v411
    %v413 = vpop.f32.mrf.mxu0
    %414 = vdwg.mxu0
    %s415 = scalar_lea.vmem [#allocation2], 5
    %v416 = vld [vmem:[%s415] sm:$0x1]
    %417 = vmatprep.subr.mxu0 0.0
    %418 = vmatpush1.msra.mxu0 %v55
    %419 = vmatprep.subr.mxu0 0.0
    %420 = vmatpush1.msra.mxu0 %v54
    %421 = vmatprep.subr.mxu0 0.0
    %422 = vmatpush1.msra.mxu0 %v53
    %423 = vmatprep.subr.mxu0 0.0
    %424 = vmatpush1.msra.mxu0 %v52
    %425 = vmatprep.subr.mxu0 0.0
    %426 = vmatpush1.msra.mxu0 %v51
    %427 = vmatprep.subr.mxu0 0.0
    %428 = vmatpush1.msra.mxu0 %v50
    %429 = vmatprep.subr.mxu0 0.0
    %430 = vmatpush1.msra.mxu0 %v49
    %431 = vmatprep.subr.mxu0 0.0
    %432 = vmatpush1.msra.mxu0 %v48
    %433 = vmatprep.subr.mxu0 0.0
    %434 = vmatpush1.msra.mxu0 %v47
    %435 = vmatprep.subr.mxu0 0.0
    %436 = vmatpush1.msra.mxu0 %v46
    %437 = vmatprep.subr.mxu0 0.0
    %438 = vmatpush1.msra.mxu0 %v45
    %439 = vmatprep.subr.mxu0 0.0
    %440 = vmatpush1.msra.mxu0 %v44
    %441 = vmatprep.subr.mxu0 0.0
    %442 = vmatpush1.msra.mxu0 %v43
    %443 = vmatprep.subr.mxu0 0.0
    %444 = vmatpush1.msra.mxu0 %v42
    %445 = vmatprep.subr.mxu0 0.0
    %446 = vmatpush1.msra.mxu0 %v41
    %447 = vmatprep.subr.mxu0 0.0
    %448 = vmatpush1.msra.mxu0 %v40
    %449 = vmatprep.subr.mxu0 0.0
    %450 = vmatpush2.msra.mxu0 0.0
    %451 = vmatprep.subr.mxu0 0.0
    %452 = vmatpush2.msra.mxu0 0.0
    %453 = vmatprep.subr.mxu0 0.0
    %454 = vmatpush2.msra.mxu0 0.0
    %455 = vmatprep.subr.mxu0 0.0
    %456 = vmatpush2.msra.mxu0 0.0
    %457 = vmatprep.subr.mxu0 0.0
    %458 = vmatpush2.msra.mxu0 0.0
    %459 = vmatprep.subr.mxu0 0.0
    %460 = vmatpush2.msra.mxu0 0.0
    %461 = vmatprep.subr.mxu0 0.0
    %462 = vmatpush2.msra.mxu0 0.0
    %463 = vmatprep.subr.mxu0 0.0
    %464 = vmatpush2.msra.mxu0 0.0
    %465 = vmatprep.subr.mxu0 0.0
    %466 = vmatpush2.msra.mxu0 0.0
    %467 = vmatprep.subr.mxu0 0.0
    %468 = vmatpush2.msra.mxu0 0.0
    %469 = vmatprep.subr.mxu0 0.0
    %470 = vmatpush2.msra.mxu0 0.0
    %471 = vmatprep.subr.mxu0 0.0
    %472 = vmatpush2.msra.mxu0 0.0
    %473 = vmatprep.subr.mxu0 0.0
    %474 = vmatpush2.msra.mxu0 0.0
    %475 = vmatprep.subr.mxu0 0.0
    %476 = vmatpush2.msra.mxu0 0.0
    %477 = vmatprep.subr.mxu0 0.0
    %478 = vmatpush2.msra.mxu0 0.0
    %479 = vmatprep.subr.mxu0 0.0
    %480 = vmatpush2.msra.mxu0 0.0
    %481 = vmatprep.mubr.f32.mxu0 0.0
    %482 = vmatmul.mubr.f32.gmra.mxu0 %v416
    %v483 = vpop.f32.mrf.mxu0
    %v484 = vadd.f32 0.0, %v483
    %v485 = vpop.f32.mrf.mxu0
    %486 = vdwg.mxu0
    %s487 = scalar_lea.vmem [#allocation2], 6
    %v488 = vld [vmem:[%s487] sm:$0x1]
    %489 = vmatprep.subr.mxu0 0.0
    %490 = vmatpush1.msra.mxu0 %v55
    %491 = vmatprep.subr.mxu0 0.0
    %492 = vmatpush1.msra.mxu0 %v54
    %493 = vmatprep.subr.mxu0 0.0
    %494 = vmatpush1.msra.mxu0 %v53
    %495 = vmatprep.subr.mxu0 0.0
    %496 = vmatpush1.msra.mxu0 %v52
    %497 = vmatprep.subr.mxu0 0.0
    %498 = vmatpush1.msra.mxu0 %v51
    %499 = vmatprep.subr.mxu0 0.0
    %500 = vmatpush1.msra.mxu0 %v50
    %501 = vmatprep.subr.mxu0 0.0
    %502 = vmatpush1.msra.mxu0 %v49
    %503 = vmatprep.subr.mxu0 0.0
    %504 = vmatpush1.msra.mxu0 %v48
    %505 = vmatprep.subr.mxu0 0.0
    %506 = vmatpush1.msra.mxu0 %v47
    %507 = vmatprep.subr.mxu0 0.0
    %508 = vmatpush1.msra.mxu0 %v46
    %509 = vmatprep.subr.mxu0 0.0
    %510 = vmatpush1.msra.mxu0 %v45
    %511 = vmatprep.subr.mxu0 0.0
    %512 = vmatpush1.msra.mxu0 %v44
    %513 = vmatprep.subr.mxu0 0.0
    %514 = vmatpush1.msra.mxu0 %v43
    %515 = vmatprep.subr.mxu0 0.0
    %516 = vmatpush1.msra.mxu0 %v42
    %517 = vmatprep.subr.mxu0 0.0
    %518 = vmatpush1.msra.mxu0 %v41
    %519 = vmatprep.subr.mxu0 0.0
    %520 = vmatpush1.msra.mxu0 %v40
    %521 = vmatprep.subr.mxu0 0.0
    %522 = vmatpush2.msra.mxu0 0.0
    %523 = vmatprep.subr.mxu0 0.0
    %524 = vmatpush2.msra.mxu0 0.0
    %525 = vmatprep.subr.mxu0 0.0
    %526 = vmatpush2.msra.mxu0 0.0
    %527 = vmatprep.subr.mxu0 0.0
    %528 = vmatpush2.msra.mxu0 0.0
    %529 = vmatprep.subr.mxu0 0.0
    %530 = vmatpush2.msra.mxu0 0.0
    %531 = vmatprep.subr.mxu0 0.0
    %532 = vmatpush2.msra.mxu0 0.0
    %533 = vmatprep.subr.mxu0 0.0
    %534 = vmatpush2.msra.mxu0 0.0
    %535 = vmatprep.subr.mxu0 0.0
    %536 = vmatpush2.msra.mxu0 0.0
    %537 = vmatprep.subr.mxu0 0.0
    %538 = vmatpush2.msra.mxu0 0.0
    %539 = vmatprep.subr.mxu0 0.0
    %540 = vmatpush2.msra.mxu0 0.0
    %541 = vmatprep.subr.mxu0 0.0
    %542 = vmatpush2.msra.mxu0 0.0
    %543 = vmatprep.subr.mxu0 0.0
    %544 = vmatpush2.msra.mxu0 0.0
    %545 = vmatprep.subr.mxu0 0.0
    %546 = vmatpush2.msra.mxu0 0.0
    %547 = vmatprep.subr.mxu0 0.0
    %548 = vmatpush2.msra.mxu0 0.0
    %549 = vmatprep.subr.mxu0 0.0
    %550 = vmatpush2.msra.mxu0 0.0
    %551 = vmatprep.subr.mxu0 0.0
    %552 = vmatpush2.msra.mxu0 0.0
    %553 = vmatprep.mubr.f32.mxu0 0.0
    %554 = vmatmul.mubr.f32.gmra.mxu0 %v488
    %v555 = vpop.f32.mrf.mxu0
    %v556 = vadd.f32 0.0, %v555
    %v557 = vpop.f32.mrf.mxu0
    %558 = vdwg.mxu0
    %s559 = scalar_lea.vmem [#allocation2], 7
    %v560 = vld [vmem:[%s559] sm:$0x1]
    %561 = vmatprep.subr.mxu0 0.0
    %562 = vmatpush1.msra.mxu0 %v55
    %563 = vmatprep.subr.mxu0 0.0
    %564 = vmatpush1.msra.mxu0 %v54
    %565 = vmatprep.subr.mxu0 0.0
    %566 = vmatpush1.msra.mxu0 %v53
    %567 = vmatprep.subr.mxu0 0.0
    %568 = vmatpush1.msra.mxu0 %v52
    %569 = vmatprep.subr.mxu0 0.0
    %570 = vmatpush1.msra.mxu0 %v51
    %571 = vmatprep.subr.mxu0 0.0
    %572 = vmatpush1.msra.mxu0 %v50
    %573 = vmatprep.subr.mxu0 0.0
    %574 = vmatpush1.msra.mxu0 %v49
    %575 = vmatprep.subr.mxu0 0.0
    %576 = vmatpush1.msra.mxu0 %v48
    %577 = vmatprep.subr.mxu0 0.0
    %578 = vmatpush1.msra.mxu0 %v47
    %579 = vmatprep.subr.mxu0 0.0
    %580 = vmatpush1.msra.mxu0 %v46
    %581 = vmatprep.subr.mxu0 0.0
    %582 = vmatpush1.msra.mxu0 %v45
    %583 = vmatprep.subr.mxu0 0.0
    %584 = vmatpush1.msra.mxu0 %v44
    %585 = vmatprep.subr.mxu0 0.0
    %586 = vmatpush1.msra.mxu0 %v43
    %587 = vmatprep.subr.mxu0 0.0
    %588 = vmatpush1.msra.mxu0 %v42
    %589 = vmatprep.subr.mxu0 0.0
    %590 = vmatpush1.msra.mxu0 %v41
    %591 = vmatprep.subr.mxu0 0.0
    %592 = vmatpush1.msra.mxu0 %v40
    %593 = vmatprep.subr.mxu0 0.0
    %594 = vmatpush2.msra.mxu0 0.0
    %595 = vmatprep.subr.mxu0 0.0
    %596 = vmatpush2.msra.mxu0 0.0
    %597 = vmatprep.subr.mxu0 0.0
    %598 = vmatpush2.msra.mxu0 0.0
    %599 = vmatprep.subr.mxu0 0.0
    %600 = vmatpush2.msra.mxu0 0.0
    %601 = vmatprep.subr.mxu0 0.0
    %602 = vmatpush2.msra.mxu0 0.0
    %603 = vmatprep.subr.mxu0 0.0
    %604 = vmatpush2.msra.mxu0 0.0
    %605 = vmatprep.subr.mxu0 0.0
    %606 = vmatpush2.msra.mxu0 0.0
    %607 = vmatprep.subr.mxu0 0.0
    %608 = vmatpush2.msra.mxu0 0.0
    %609 = vmatprep.subr.mxu0 0.0
    %610 = vmatpush2.msra.mxu0 0.0
    %611 = vmatprep.subr.mxu0 0.0
    %612 = vmatpush2.msra.mxu0 0.0
    %613 = vmatprep.subr.mxu0 0.0
    %614 = vmatpush2.msra.mxu0 0.0
    %615 = vmatprep.subr.mxu0 0.0
    %616 = vmatpush2.msra.mxu0 0.0
    %617 = vmatprep.subr.mxu0 0.0
    %618 = vmatpush2.msra.mxu0 0.0
    %619 = vmatprep.subr.mxu0 0.0
    %620 = vmatpush2.msra.mxu0 0.0
    %621 = vmatprep.subr.mxu0 0.0
    %622 = vmatpush2.msra.mxu0 0.0
    %623 = vmatprep.subr.mxu0 0.0
    %624 = vmatpush2.msra.mxu0 0.0
    %625 = vmatprep.mubr.f32.mxu0 0.0
    %626 = vmatmul.mubr.f32.gmra.mxu0 %v560
    %v627 = vpop.f32.mrf.mxu0
    %v628 = vadd.f32 0.0, %v627
    %v629 = vpop.f32.mrf.mxu0
    %630 = vdwg.mxu0
    %v631 = vmax.f32 %v124, %v196
    %v632 = vmax.f32 %v631, %v268
    %v633 = vmax.f32 %v632, %v340
    %v634 = vmax.f32 %v633, %v412
    %v635 = vmax.f32 %v634, %v484
    %v636 = vmax.f32 %v635, %v556
    %v637 = vmax.f32 %v636, %v628
    %v638 = vsub.f32 %v124, %v637
    %v639 = vmul.f32 %v638, 1.442695
    %v640 = vpow.pop %v639
    %v641 = vadd.f32 %v640, 0.0
    %v642 = vmul.f32 %v640, %v56
    %v643 = vadd.f32 %v642, 0.0
    %v644 = vsub.f32 %v196, %v637
    %v645 = vmul.f32 %v644, 1.442695
    %v646 = vpow.pop %v645
    %v647 = vadd.f32 %v641, %v646
    %v648 = vmul.f32 %v646, %v128
    %v649 = vadd.f32 %v643, %v648
    %v650 = vsub.f32 %v268, %v637
    %v651 = vmul.f32 %v650, 1.442695
    %v652 = vpow.pop %v651
    %v653 = vadd.f32 %v647, %v652
    %v654 = vmul.f32 %v652, %v200
    %v655 = vadd.f32 %v649, %v654
    %v656 = vsub.f32 %v340, %v637
    %v657 = vmul.f32 %v656, 1.442695
    %v658 = vpow.pop %v657
    %v659 = vadd.f32 %v653, %v658
    %v660 = vmul.f32 %v658, %v272
    %v661 = vadd.f32 %v655, %v660
    %v662 = vsub.f32 %v412, %v637
    %v663 = vmul.f32 %v662, 1.442695
    %v664 = vpow.pop %v663
    %v665 = vadd.f32 %v659, %v664
    %v666 = vmul.f32 %v664, %v344
    %v667 = vadd.f32 %v661, %v666
    %v668 = vsub.f32 %v484, %v637
    %v669 = vmul.f32 %v668, 1.442695
    %v670 = vpow.pop %v669
    %v671 = vadd.f32 %v665, %v670
    %v672 = vmul.f32 %v670, %v416
    %v673 = vadd.f32 %v667, %v672
    %v674 = vsub.f32 %v556, %v637
    %v675 = vmul.f32 %v674, 1.442695
    %v676 = vpow.pop %v675
    %v677 = vadd.f32 %v671, %v676
    %v678 = vmul.f32 %v676, %v488
    %v679 = vadd.f32 %v673, %v678
    %v680 = vsub.f32 %v628, %v637
    %v681 = vmul.f32 %v680, 1.442695
    %v682 = vpow.pop %v681
    %v683 = vadd.f32 %v677, %v682
    %v684 = vmul.f32 %v682, %v560
    %v685 = vadd.f32 %v679, %v684
    %v686 = vrcp.pop %v683
    %v687 = vmul.f32 %v685, %v686
    %688 = vst [vmem:[#allocation7] sm:$0x1] %v687
    // Predicated region
    $region18: #{tpu_custom_call.1} parent=1 // pred_check
      _
    $region19: #{tpu_custom_call.1} parent=1 // pred_check_branch
      %690 = sbr.rel (0) target = $region21
    $region20: #{tpu_custom_call.1} parent=1 // pred_region
      %s692 = ssub.s32 16, 16
      %693 = vsyncadd [#allocation4], %s692
      %s695 = sshll.u32 [#allocation7], 4
      %s696 = int_to_ptr.vmem [resolvable:$true] %s695
      %698 = dma.vmem_to_hbm [thread:$0]  %s696, 16, %s2, [#allocation4]
    $region21: #{tpu_custom_call.1} parent=1 // pred_fallthru
      _
    // Predicated region
    $region22: #{tpu_custom_call.1} parent=1 // pred_check
      _
    $region23: #{tpu_custom_call.1} parent=1 // pred_check_branch
      %700 = sbr.rel (0) target = $region25
    $region24: #{tpu_custom_call.1} parent=1 // pred_region
      %701 = dma.done [#allocation4], 16
    $region25: #{tpu_custom_call.1} parent=1 // pred_fallthru
      _
    %702 = vsyncpa [#allocation3], 1
    %703 = vsyncpa [#allocation6], 1
    %704 = vsyncpa [#allocation4], 1

</llo_original>
